<compile_context>
chip_gen: v5e
topology: v5e:2x2
jax: 0.10.0
libtpu: 0.0.40
codegen_flags: <defaults>
</compile_context>

<pallas_src>
import functools

import jax
import jax.numpy as jnp
from jax import lax
from jax.experimental import pallas as pl
from jax.experimental.pallas import tpu as pltpu


_HARD_TM_CAP = 1024              # rows; the MXU streams M, so VMEM sets the real cap
_VMEM_BUDGET_FRACTION = 0.70     # fraction of physical VMEM used for tile selection
_FALLBACK_VMEM_BYTES = 64 << 20  # v7x physical VMEM (smallest across v5e/v6e/v7x)


def _round_up(x: int, m: int) -> int:
    return -(-x // m) * m


def _vmem_capacity_bytes() -> int:
    try:
        cap = getattr(pltpu.get_tpu_info(), "vmem_capacity_bytes", None)
        if cap:
            return int(cap)
    except Exception:
        pass
    return _FALLBACK_VMEM_BYTES


def _invariant_spec(block_shape, index_map):
    """BlockSpec for a grid-invariant operand; single resident copy when supported."""
    try:
        return pl.BlockSpec(block_shape, index_map, pipeline_mode=pl.Buffered(1))
    except (TypeError, ValueError, AttributeError):
        return pl.BlockSpec(block_shape, index_map)


# (tm, tk) x (E, tk) -> (tm, E): contract the trailing K axis of both operands,
# so the weight stays in its native Conv2d (E, K) layout (no host relayout).
_CONTRACT_LAST = (((1,), (1,)), ((), ()))


def _pos_tile(pos_ref, tm, n_pos_blocks):
    """tm rows of the VMEM-resident pos(+bias) table for the current row tile."""
    if n_pos_blocks == 1:
        return pos_ref[...]                      # table already has exactly tm rows
    off = pl.multiple_of((pl.program_id(0) % n_pos_blocks) * tm, 8)
    return pos_ref[pl.ds(off, tm), :]


def _patch_embed_kernel(patches_ref, w_ref, pos_ref, o_ref, *, tm, n_pos_blocks):
    # Single-shot contraction over K; f32 MXU accumulation, f32 epilogue add.
    proj = lax.dot_general(patches_ref[...], w_ref[...], _CONTRACT_LAST,
                           preferred_element_type=jnp.float32)
    o_ref[...] = (proj + _pos_tile(pos_ref, tm, n_pos_blocks)).astype(o_ref.dtype)


def _patch_embed_kernel_ktiled(patches_ref, w_ref, pos_ref, o_ref, acc_ref, *,
                               tm, n_pos_blocks):
    # K is tiled on the trailing "arbitrary" grid axis; accumulate in f32 scratch.
    k = pl.program_id(1)

    @pl.when(k == 0)
    def _init():
        acc_ref[...] = jnp.zeros_like(acc_ref)

    acc_ref[...] += lax.dot_general(patches_ref[...], w_ref[...], _CONTRACT_LAST,
                                    preferred_element_type=jnp.float32)

    @pl.when(k == pl.num_programs(1) - 1)
    def _finalize():
        o_ref[...] = (acc_ref[...]
                      + _pos_tile(pos_ref, tm, n_pos_blocks)).astype(o_ref.dtype)


def _tm_candidates(n_pad, batch, cap):
    """Row-tile sizes that keep the pos wrap exact: divisors of N_pad (per-image
    tiles) or whole-image multiples r*N_pad with r dividing the batch."""
    cap = max(8, min(cap, _HARD_TM_CAP))
    cands = set()
    for t in range(8, min(n_pad, cap) + 1, 8):
        if n_pad % t == 0:
            cands.add(t)
    r = 2
    while r * n_pad <= cap:
        if batch % r == 0:
            cands.add(r * n_pad)
        r += 1
    if not cands:
        cands.add(min(8, n_pad))
    return sorted(cands, reverse=True)


def _pick_tm(cands, m_pad, fits):
    # Prefer >= 4 grid steps (pipelining + both v7x TensorCores), then >= 2, then
    # anything; within each tier pick the largest tile that fits the VMEM budget.
    for min_steps in (4, 2, 1):
        for tm in cands:
            if m_pad // tm < min_steps:
                continue
            if fits(tm):
                return tm
    return cands[-1]


def vit_patch_embedding(x, weight, bias, pos_embed, patch_size,
                        compute_dtype=jnp.bfloat16, out_dtype=None,
                        _force_k_grid=None):
    """Forward pass of ViTPatchEmbedding.

    x:         (B, C, H, W)
    weight:    (E, C, p, p)  Conv2d weight
    bias:      (E,)          Conv2d bias
    pos_embed: (1, N, E)     positional embedding, N = (H//p) * (W//p)
    returns:   (B, N, E) in out_dtype (defaults to x.dtype; pass jnp.bfloat16 to
               halve the output HBM write when downstream layers accept bf16).
    """
    B, C, H, W = x.shape
    E = weight.shape[0]
    p = patch_size
    Gh, Gw = H // p, W // p
    N = Gh * Gw
    K = C * p * p
    out_dtype = x.dtype if out_dtype is None else jnp.dtype(out_dtype)

    in_bytes = jnp.dtype(compute_dtype).itemsize
    out_bytes = jnp.dtype(out_dtype).itemsize

    # ---- im2col for kernel == stride: (B,C,H,W) -> (B, N, K), (c, kh, kw) order ----
    # allow_input_fusion below lets XLA fuse this reshape/transpose (+ bf16 cast)
    # into the pallas_call operand read under jit.
    patches = (x.reshape(B, C, Gh, p, Gw, p)
                 .transpose(0, 2, 4, 1, 3, 5)
                 .reshape(B, N, K)
                 .astype(compute_dtype))
    w_mat = weight.reshape(E, K).astype(compute_dtype)            # native (E, K) layout
    # Fold conv bias into the positional embedding: one f32 epilogue add stream.
    pos_plus_bias = (pos_embed.astype(jnp.float32).reshape(N, E)
                     + bias.astype(jnp.float32)[None, :])

    # ---- pad N so row tiles are 8-aligned and never straddle an image boundary ----
    N_pad = _round_up(N, 8)
    if N_pad != N:
        patches = jnp.pad(patches, ((0, 0), (0, N_pad - N), (0, 0)))
        pos_plus_bias = jnp.pad(pos_plus_bias, ((0, N_pad - N), (0, 0)))
    M_pad = B * N_pad

    # ---- generation-aware VMEM budget and tile selection ---------------------------
    vmem_cap = _vmem_capacity_bytes()
    budget = int(_VMEM_BUDGET_FRACTION * vmem_cap)
    cands = _tm_candidates(N_pad, B, _HARD_TM_CAP)

    def _fits_single_k(tm):
        pos_rows = max(N_pad, tm)
        need = (2 * tm * K * in_bytes        # patch tile, double-buffered
                + E * K * in_bytes           # weight, one resident copy (Buffered(1))
                + pos_rows * E * 4           # pos(+bias) table, one resident copy
                + 2 * tm * E * out_bytes)    # output tile, double-buffered
        return need <= budget

    single_k = _fits_single_k(cands[-1]) and not (_force_k_grid and _force_k_grid > 1)

    if single_k:
        K_pad, tk, num_k = K, K, 1
        tm = _pick_tm(cands, M_pad, _fits_single_k)
    else:
        # Very large K*E: tile K on a trailing "arbitrary" axis with an f32
        # accumulator instead of forcing the whole weight to be VMEM-resident.
        K_pad = _round_up(K, 128)
        if K_pad != K:                       # zero padding along K is exact
            patches = jnp.pad(patches, ((0, 0), (0, 0), (0, K_pad - K)))
            w_mat = jnp.pad(w_mat, ((0, 0), (0, K_pad - K)))
        tk_cands = [t for t in range(128, K_pad + 1, 128) if K_pad % t == 0]
        if _force_k_grid and _force_k_grid > 1:
            target = max(128, K_pad // _force_k_grid)
            tk = min(tk_cands, key=lambda t: abs(t - target))
        else:
            tk = max((t for t in tk_cands if 2 * t * E * in_bytes <= budget // 2),
                     default=128)
        num_k = K_pad // tk

        def _fits_k_tiled(tm):
            pos_rows = max(N_pad, tm)
            need = (2 * tm * tk * in_bytes   # patch tile
                    + 2 * tk * E * in_bytes  # weight tile (varies along k)
                    + pos_rows * E * 4       # pos(+bias) table
                    + 2 * tm * E * out_bytes # output tile
                    + tm * E * 4)            # f32 accumulator scratch
            return need <= budget

        tm = _pick_tm(cands, M_pad, _fits_k_tiled)

    grid_m = M_pad // tm
    n_pos_blocks = max(N_pad // tm, 1)

    # Pos(+bias) table kept resident in VMEM for the whole grid (tiny: ViT-H is
    # ~1.3 MiB) instead of re-streaming (tm, E) f32 tiles from HBM every step.
    if tm > N_pad:                            # row tile spans tm // N_pad whole images
        pos_table = jnp.tile(pos_plus_bias, (tm // N_pad, 1))
    else:
        pos_table = pos_plus_bias
    pos_rows = pos_table.shape[0]

    patches2d = patches.reshape(M_pad, K_pad)

    if single_k:
        kernel = functools.partial(_patch_embed_kernel,
                                   tm=tm, n_pos_blocks=n_pos_blocks)
        scratch_shapes = []
        w_spec = _invariant_spec((E, K_pad), lambda i, k: (0, 0))
    else:
        kernel = functools.partial(_patch_embed_kernel_ktiled,
                                   tm=tm, n_pos_blocks=n_pos_blocks)
        scratch_shapes = [pltpu.VMEM((tm, E), jnp.float32)]
        w_spec = pl.BlockSpec((E, tk), lambda i, k: (0, k))

    pos_spec = _invariant_spec((pos_rows, E), lambda i, k: (0, 0))

    vmem_est = (2 * tm * tk * in_bytes
                + (1 if single_k else 2) * tk * E * in_bytes
                + pos_rows * E * 4
                + 2 * tm * E * out_bytes
                + (0 if single_k else tm * E * 4))
    vmem_limit = max(2 * vmem_est, 32 << 20)            # comfortable headroom
    vmem_limit = min(vmem_limit, int(0.85 * vmem_cap))  # stay inside physical VMEM
    vmem_limit = int(max(vmem_limit, vmem_est + (2 << 20)))  # never clamp below need

    out2d = pl.pallas_call(
        kernel,
        out_shape=jax.ShapeDtypeStruct((M_pad, E), out_dtype),
        grid_spec=pltpu.PrefetchScalarGridSpec(
            num_scalar_prefetch=0,
            grid=(grid_m, num_k),
            in_specs=[
                pl.BlockSpec((tm, tk), lambda i, k: (i, k)),   # patch rows
                w_spec,                                        # projection weight
                pos_spec,                                      # resident pos + bias
            ],
            out_specs=pl.BlockSpec((tm, E), lambda i, k: (i, 0)),
            scratch_shapes=scratch_shapes,
        ),
        compiler_params=pltpu.CompilerParams(
            dimension_semantics=("parallel", "arbitrary"),
            allow_input_fusion=[True, True, True],
            vmem_limit_bytes=vmem_limit,
        ),
    )(patches2d, w_mat, pos_table)

    out = out2d.reshape(B, N_pad, E)
    if N_pad != N:
        out = out[:, :N, :]
    return out


def reference(x, weight, bias, pos_embed, patch_size):
    """Pure-JAX f32 reference mirroring the PyTorch forward (conv via matmul)."""
    B, C, H, W = x.shape
    E = weight.shape[0]
    p = patch_size
    Gh, Gw = H // p, W // p
    N = Gh * Gw
    K = C * p * p
    patches = (x.reshape(B, C, Gh, p, Gw, p)
                 .transpose(0, 2, 4, 1, 3, 5)
                 .reshape(B, N, K))
    proj = patches @ weight.reshape(E, K).T + bias[None, None, :]
    return proj + pos_embed


def _run_case(name, key, B, C, H, W, p, E, force_k_grid=None):
    Gh, Gw = H // p, W // p
    N = Gh * Gw
    kx, kw, kb, kp = jax.random.split(key, 4)
    x = jax.random.normal(kx, (B, C, H, W), dtype=jnp.float32)
    weight = jax.random.normal(kw, (E, C, p, p), dtype=jnp.float32) * 0.02
    bias = jax.random.normal(kb, (E,), dtype=jnp.float32) * 0.02
    pos = jax.random.normal(kp, (1, N, E), dtype=jnp.float32) * 0.02

    fn = jax.jit(functools.partial(vit_patch_embedding, patch_size=p,
                                   _force_k_grid=force_k_grid))
    out = jax.block_until_ready(fn(x, weight, bias, pos))
    ref = reference(x, weight, bias, pos, p)
    assert out.shape == (B, N, E), (name, out.shape)
    out_f32 = out.astype(jnp.float32)
    err = float(jnp.max(jnp.abs(out_f32 - ref)))
    # bf16 matmul operands with f32 accumulation: error << 1e-2 at these scales.
    assert jnp.allclose(out_f32, ref, atol=2e-2, rtol=2e-2), (name, err)


if __name__ == "__main__":
    key = jax.random.PRNGKey(0)
    k1, k2, k3 = jax.random.split(key, 3)

    # (1) module-consistent small shapes: img (16, 32), patch 8, C=4, E=32 -> N=8.
    _run_case("base", k1, B=2, C=4, H=16, W=32, p=8, E=32)
    # (2) N=15 (not a multiple of 8): exercises N padding + the in-kernel dynamic
    #     pos-table slice (n_pos_blocks > 1).
    _run_case("ragged_n", k2, B=1, C=3, H=40, W=24, p=8, E=32)
    # (3) forced K tiling: exercises the accumulator (trailing K grid axis) path.
    _run_case("k_tiled", k3, B=2, C=4, H=16, W=32, p=8, E=32, force_k_grid=2)

    print("KERNEL_OK")
</pallas_src>

<mosaic_0001>
module attributes {stable_mosaic.version = 11 : i64} {
  func.func @_patch_embed_kernel(%arg0: i32, %arg1: i32, %arg2: memref<8x256xbf16, #tpu.memory_space<vmem>>, %arg3: memref<32x256xbf16, #tpu.memory_space<vmem>>, %arg4: memref<8x32xf32, #tpu.memory_space<vmem>>, %arg5: memref<8x32xf32, #tpu.memory_space<vmem>>) attributes {dimension_semantics = [#tpu.dimension_semantics<parallel>, #tpu.dimension_semantics<arbitrary>], iteration_bounds = array<i64: 2, 1>, scalar_prefetch = 0 : i64, scratch_operands = 0 : i64, tpu.core_type = #tpu.core_type<tc>, window_params = [{transform_indices = @transform_0, window_bounds = array<i64: 8, 256>}, {pipeline_mode = #tpu.pipeline_mode<synchronous>, transform_indices = @transform_1, window_bounds = array<i64: 32, 256>}, {pipeline_mode = #tpu.pipeline_mode<synchronous>, transform_indices = @transform_2, window_bounds = array<i64: 8, 32>}, {transform_indices = @transform_3, window_bounds = array<i64: 8, 32>}]} {
    %c0 = arith.constant 0 : index
    %c0_0 = arith.constant 0 : index
    %0 = vector.load %arg2[%c0, %c0_0] : memref<8x256xbf16, #tpu.memory_space<vmem>>, vector<8x256xbf16>
    %c0_1 = arith.constant 0 : index
    %c0_2 = arith.constant 0 : index
    %1 = vector.load %arg3[%c0_1, %c0_2] : memref<32x256xbf16, #tpu.memory_space<vmem>>, vector<32x256xbf16>
    %cst = arith.constant dense<0.000000e+00> : vector<8x32xf32>
    %2 = tpu.matmul %0, %1, %cst {dimension_numbers = #tpu.dot_dimension_numbers<[1], [1], [0], [0], [0, 0, 1, 0], [], []>} : vector<8x256xbf16>, vector<32x256xbf16>, vector<8x32xf32> -> vector<8x32xf32>
    %c0_3 = arith.constant 0 : index
    %c0_4 = arith.constant 0 : index
    %3 = vector.load %arg4[%c0_3, %c0_4] : memref<8x32xf32, #tpu.memory_space<vmem>>, vector<8x32xf32>
    %4 = arith.addf %2, %3 : vector<8x32xf32>
    %c0_5 = arith.constant 0 : index
    %c0_6 = arith.constant 0 : index
    %5 = vector.load %arg5[%c0_5, %c0_6] : memref<8x32xf32, #tpu.memory_space<vmem>>, vector<8x32xf32>
    tpu.vector_store %arg5[%c0_5, %c0_6], %4 {strides = array<i32>} : memref<8x32xf32, #tpu.memory_space<vmem>>, vector<8x32xf32>,
    return
  }
  func.func @transform_0(%arg0: i32, %arg1: i32) -> (i32, i32) {
    %c0_i32 = arith.constant 0 : i32
    return %arg0, %arg1 : i32, i32
  }
  func.func @transform_1(%arg0: i32, %arg1: i32) -> (i32, i32) {
    %c0_i32 = arith.constant 0 : i32
    %c0_i32_0 = arith.constant 0 : i32
    %c0_i32_1 = arith.constant 0 : i32
    return %c0_i32, %c0_i32_0 : i32, i32
  }
  func.func @transform_2(%arg0: i32, %arg1: i32) -> (i32, i32) {
    %c0_i32 = arith.constant 0 : i32
    %c0_i32_0 = arith.constant 0 : i32
    %c0_i32_1 = arith.constant 0 : i32
    return %c0_i32, %c0_i32_0 : i32, i32
  }
  func.func @transform_3(%arg0: i32, %arg1: i32) -> (i32, i32) {
    %c0_i32 = arith.constant 0 : i32
    %c0_i32_0 = arith.constant 0 : i32
    return %arg0, %c0_i32 : i32, i32
  }
}

</mosaic_0001>

<llo_original>
// kernel: vit_patch_embedding.2
$region0: #{vit_patch_embedding.2}
  #allocation0 [shape = 'u32[]', space=smem, size = 0x4, offset = 0x4, fixed_abs, tag = 'smem constant byte address 0x4 - core index']
  #allocation1 [shape = 'u32[72,128]{1,0:T(1,128)}', space=vmem, size = 0x9000, scoped, tag = 'internal scratch']
  %s0 = inlined_call_operand.vmem [shape: bf16[16,256], index: 0, kind: input, shape index: {}]
  %s1 = inlined_call_operand.vmem [shape: bf16[32,256], index: 1, kind: input, shape index: {}]
  %s2 = inlined_call_operand.vmem [shape: f32[1,8,32], index: 2, kind: input, shape index: {}]
  %s3 = inlined_call_operand.vmem [shape: f32[32], index: 3, kind: input, shape index: {}]
  %s4 = inlined_call_operand.hbm [shape: f32[16,32], index: 4, kind: output, shape index: {}]
  %s5 = sld [smem:[#allocation0]]
  $region49: #{vit_patch_embedding.2} parent=0
    _
  %s7 = ssub.s32 1, %s5
  %s8 = scalar_select 0, %s7, %s5
  $region1: #{vit_patch_embedding.2} parent=0
    #allocation2 [shape = 'u8[8192]{0}', space=vmem, size = 0x2000, scoped, tag = 'output window, operand 0']
    #allocation3 [shape = 's32[2]{0}', space=sflag, size = 0x8, scoped, tag = 'scoped memory for vit_patch_embedding.2']
    %9 = vsyncpa [#allocation3], 0
    %s10 = scalar_lea.sflag [#allocation3], 1
    %11 = vsyncpa %s10, 0
    loop: start=0, step=1, limit=4
    $region2: #{vit_patch_embedding.2} parent=1 // loop_pre_header
      _
    $region3: #{vit_patch_embedding.2} parent=1 // loop_header
      %s13 = sphi 0, %s17
      %p14 = scmp.ge.s32.totalorder %s13, 4
      %s20 = sphi 0, %s32
      %s21 = sphi 0, %s28
      %s22 = sphi 0, %s20
      %s23 = sphi 0, %s21
      %s24 = sphi 0, %s22
      %s25 = sphi 0, %s23
      %s37 = sphi 0, %s39
      %s40 = sphi 0, %s37
      %s41 = sphi 0, %s40
      %s57 = sphi 0, %s41
      %s61 = sphi 0, %s61
      %s63 = sphi 0, %s61
      %s64 = sphi 0, %s63
      %s78 = sphi 0, %s64
      %s82 = sphi 0, %s82
      %s84 = sphi 0, %s82
      %s85 = sphi 0, %s84
      %s99 = sphi 0, %s85
      %s103 = sphi 0, %s103
      %s105 = sphi 0, %s103
      %s106 = sphi 0, %s105
      %s120 = sphi 0, %s106
      %s126 = sphi 0, %s128
      %s129 = sphi 0, %s126
      %s130 = sphi 0, %s129
      %s146 = sphi 0, %s130
    $region4: #{vit_patch_embedding.2} parent=1 // loop_header_branch
      %16 = sbr.rel (%p14) target = $region8
    $region5: #{vit_patch_embedding.2} parent=1 // loop_body
      %s18 = ssub.s32 %s13, 1
      %s19 = ssub.s32 %s13, 2
      %s26 = sadd.s32 1, %s21
      %p27 = scmp.ge.s32.totalorder %s26, 1
      %s28 = scalar_select %p27, 0, %s26
      %s29 = sadd.s32 1, %s20
      %s30 = scalar_select %p27, %s29, %s20
      %p31 = scmp.ge.s32.totalorder %s30, 2
      %s32 = scalar_select %p31, 0, %s30
      %s33 = ssub.s32 %s20, %s32
      %s34 = ssub.s32 %s21, %s28
      %s35 = sor.u32 %s33, %s34
      %p36 = scmp.eq.s32.totalorder %s35, 0
      %s38 = sadd.s32 %s37, 1
      %s39 = scalar_select %p36, %s37, %s38
      %p42 = pneg %p36
      %p43 = scmp.eq.s32.totalorder %s13, 1
      %p44 = por %p42, %p43
      %p45 = scmp.ne.s32.totalorder %s37, %s40
      %p46 = scmp.eq.s32.totalorder %s13, 0
      %p47 = por %p45, %p46
      %p48 = scmp.ne.s32.totalorder %s37, %s40
      %p49 = scmp.eq.s32.totalorder %s18, 1
      %p50 = por %p48, %p49
      %p51 = scmp.ne.s32.totalorder %s40, %s41
      %p52 = scmp.eq.s32.totalorder %s18, 0
      %p53 = por %p51, %p52
      %p54 = scmp.ne.s32.totalorder %s40, %s41
      %p55 = scmp.eq.s32.totalorder %s19, 1
      %p56 = por %p54, %p55
      %p58 = scmp.ne.s32.totalorder %s41, %s57
      %p59 = scmp.eq.s32.totalorder %s19, 0
      %p60 = por %p58, %p59
      %s62 = sadd.s32 %s61, 1
      %p65 = scmp.eq.s32.totalorder %s13, 1
      %p66 = scmp.ne.s32.totalorder %s61, %s63
      %p67 = scmp.eq.s32.totalorder %s13, 0
      %p68 = por %p66, %p67
      %p69 = scmp.ne.s32.totalorder %s61, %s63
      %p70 = scmp.eq.s32.totalorder %s18, 1
      %p71 = por %p69, %p70
      %p72 = scmp.ne.s32.totalorder %s63, %s64
      %p73 = scmp.eq.s32.totalorder %s18, 0
      %p74 = por %p72, %p73
      %p75 = scmp.ne.s32.totalorder %s63, %s64
      %p76 = scmp.eq.s32.totalorder %s19, 1
      %p77 = por %p75, %p76
      %p79 = scmp.ne.s32.totalorder %s64, %s78
      %p80 = scmp.eq.s32.totalorder %s19, 0
      %p81 = por %p79, %p80
      %s83 = sadd.s32 %s82, 1
      %p86 = scmp.eq.s32.totalorder %s13, 1
      %p87 = scmp.ne.s32.totalorder %s82, %s84
      %p88 = scmp.eq.s32.totalorder %s13, 0
      %p89 = por %p87, %p88
      %p90 = scmp.ne.s32.totalorder %s82, %s84
      %p91 = scmp.eq.s32.totalorder %s18, 1
      %p92 = por %p90, %p91
      %p93 = scmp.ne.s32.totalorder %s84, %s85
      %p94 = scmp.eq.s32.totalorder %s18, 0
      %p95 = por %p93, %p94
      %p96 = scmp.ne.s32.totalorder %s84, %s85
      %p97 = scmp.eq.s32.totalorder %s19, 1
      %p98 = por %p96, %p97
      %p100 = scmp.ne.s32.totalorder %s85, %s99
      %p101 = scmp.eq.s32.totalorder %s19, 0
      %p102 = por %p100, %p101
      %s104 = sadd.s32 %s103, 1
      %p107 = scmp.eq.s32.totalorder %s13, 1
      %p108 = scmp.ne.s32.totalorder %s103, %s105
      %p109 = scmp.eq.s32.totalorder %s13, 0
      %p110 = por %p108, %p109
      %p111 = scmp.ne.s32.totalorder %s103, %s105
      %p112 = scmp.eq.s32.totalorder %s18, 1
      %p113 = por %p111, %p112
      %p114 = scmp.ne.s32.totalorder %s105, %s106
      %p115 = scmp.eq.s32.totalorder %s18, 0
      %p116 = por %p114, %p115
      %p117 = scmp.ne.s32.totalorder %s105, %s106
      %p118 = scmp.eq.s32.totalorder %s19, 1
      %p119 = por %p117, %p118
      %p121 = scmp.ne.s32.totalorder %s106, %s120
      %p122 = scmp.eq.s32.totalorder %s19, 0
      %p123 = por %p121, %p122
      %s124 = ssub.s32 %s20, %s32
      %p125 = scmp.eq.s32.totalorder %s124, 0
      %s127 = sadd.s32 %s126, 1
      %s128 = scalar_select %p125, %s126, %s127
      %p131 = pneg %p125
      %p132 = scmp.eq.s32.totalorder %s13, 1
      %p133 = por %p131, %p132
      %p134 = scmp.ne.s32.totalorder %s126, %s129
      %p135 = scmp.eq.s32.totalorder %s13, 0
      %p136 = por %p134, %p135
      %p137 = scmp.ne.s32.totalorder %s126, %s129
      %p138 = scmp.eq.s32.totalorder %s18, 1
      %p139 = por %p137, %p138
      %p140 = scmp.ne.s32.totalorder %s129, %s130
      %p141 = scmp.eq.s32.totalorder %s18, 0
      %p142 = por %p140, %p141
      %p143 = scmp.ne.s32.totalorder %s129, %s130
      %p144 = scmp.eq.s32.totalorder %s19, 1
      %p145 = por %p143, %p144
      %p147 = scmp.ne.s32.totalorder %s130, %s146
      %p148 = scmp.eq.s32.totalorder %s19, 0
      %p149 = por %p147, %p148
      %p150 = scmp.le.s32.totalorder 1, %s13
      %p151 = scmp.lt.s32.totalorder %s13, 3
      %p152 = pnand %p150, %p151
      %p153 = pneg %p152
      // Predicated region
      $region9: #{vit_patch_embedding.2} parent=5 // pred_check
        _
      $region10: #{vit_patch_embedding.2} parent=5 // pred_check_branch
        %155 = sbr.rel (%p152) target = $region12
      $region11: #{vit_patch_embedding.2} parent=5 // pred_region
        %s156 = ssub.s32 %s13, 1
        // Predicated region
        $region13: #{vit_patch_embedding.2} parent=11 // pred_check
          %p157 = pneg %p74
        $region14: #{vit_patch_embedding.2} parent=11 // pred_check_branch
          %159 = sbr.rel (%p157) target = $region16
        $region15: #{vit_patch_embedding.2} parent=11 // pred_region
          _
        $region16: #{vit_patch_embedding.2} parent=11 // pred_fallthru
          _
        // Predicated region
        $region17: #{vit_patch_embedding.2} parent=11 // pred_check
          %p160 = pneg %p95
        $region18: #{vit_patch_embedding.2} parent=11 // pred_check_branch
          %162 = sbr.rel (%p160) target = $region20
        $region19: #{vit_patch_embedding.2} parent=11 // pred_region
          _
        $region20: #{vit_patch_embedding.2} parent=11 // pred_fallthru
          _
        // Predicated region
        $region21: #{vit_patch_embedding.2} parent=11 // pred_check
          %p163 = pneg %p116
        $region22: #{vit_patch_embedding.2} parent=11 // pred_check_branch
          %165 = sbr.rel (%p163) target = $region24
        $region23: #{vit_patch_embedding.2} parent=11 // pred_region
          _
        $region24: #{vit_patch_embedding.2} parent=11 // pred_fallthru
          _
      $region12: #{vit_patch_embedding.2} parent=5 // pred_fallthru
        _
      %p166 = scmp.lt.s32.totalorder %s13, 2
      // Predicated region
      $region25: #{vit_patch_embedding.2} parent=5 // pred_check
        %p167 = pneg %p166
      $region26: #{vit_patch_embedding.2} parent=5 // pred_check_branch
        %169 = sbr.rel (%p167) target = $region28
      $region27: #{vit_patch_embedding.2} parent=5 // pred_region
        // Predicated region
        $region29: #{vit_patch_embedding.2} parent=27 // pred_check
          %p170 = pneg %p47
        $region30: #{vit_patch_embedding.2} parent=27 // pred_check_branch
          %172 = sbr.rel (%p170) target = $region32
        $region31: #{vit_patch_embedding.2} parent=27 // pred_region
          %s173 = smul.u32 2, %s21
          %p174 = scmp.lt.s32.totalorder %s20, 1
          %s175 = scalar_select %p174, %s20, 1
          %p176 = scmp.lt.s32.totalorder %s173, 1
          %s177 = scalar_select %p176, %s173, 1
          %s178 = smul.addr %s175, 2
          %s179 = sadd.s32 %s177, %s178
          %s180 = smul.addr %s179, 4
          %s181 = scalar_lea.vmem %s0, %s180
          %s182 = smul.u32 2, %s21
        $region32: #{vit_patch_embedding.2} parent=27 // pred_fallthru
          _
      $region28: #{vit_patch_embedding.2} parent=5 // pred_fallthru
        _
      %p183 = scmp.le.s32.totalorder 1, %s13
      %p184 = scmp.lt.s32.totalorder %s13, 3
      %p185 = pnand %p183, %p184
      %p186 = pneg %p185
      // Predicated region
      $region33: #{vit_patch_embedding.2} parent=5 // pred_check
        _
      $region34: #{vit_patch_embedding.2} parent=5 // pred_check_branch
        %188 = sbr.rel (%p185) target = $region36
      $region35: #{vit_patch_embedding.2} parent=5 // pred_region
        #allocation4 [shape = 'u8[4096]{0}', space=vmem, size = 0x1000, dematerialized = true, scoped, tag = 'FusionAdapter Buffer %bitcast_add_fusion.1 = f32[8,32]{1,0:T(8,128)} fusion(%param_2.2, %param_3.1), kind=kLoop, calls=%fused_computation.1.clone.clone, metadata={op_name="jit(vit_patch_embedding)/add" stack_frame_id=13}']
        %s189 = ssub.s32 %s13, 1
        %s190 = smul.u32 2, %s23
        %p191 = scmp.lt.s32.totalorder %s22, 1
        %s192 = scalar_select %p191, %s22, 1
        %p193 = scmp.lt.s32.totalorder %s190, 1
        %s194 = scalar_select %p193, %s190, 1
        %s195 = smul.addr %s192, 2
        %s196 = sadd.s32 %s194, %s195
        %s197 = smul.addr %s196, 4
        %s198 = scalar_lea.vmem %s0, %s197
        %p199 = pneg %p53
        %p200 = pneg %p50
        %p201 = pneg %p74
        %p202 = pneg %p71
        %p203 = pneg %p95
        %p204 = pneg %p92
        %p205 = pneg %p116
        %p206 = pneg %p113
        %p207 = pneg %p142
        %p208 = pneg %p139
        %s209 = sand.u32 %s129, 1
        %s210 = scalar_lea.sflag [#allocation3], %s209
        %s211 = sand.u32 %s129, 1
        %s212 = smul.addr %s211, 8
        %s213 = scalar_lea.vmem [#allocation2], %s212
        %s214 = smul.u32 2, %s23
        %p215 = scmp.lt.s32.totalorder %s22, 1
        %s216 = scalar_select %p215, %s22, 1
        %p217 = scmp.lt.s32.totalorder %s214, 1
        %s218 = scalar_select %p217, %s214, 1
        %s219 = smul.addr %s216, 2
        %s220 = sadd.s32 %s218, %s219
        %s221 = smul.addr %s220, 4
        %s222 = scalar_lea.vmem %s0, %s221
        %s223 = smul.u32 2, %s23
        %v224 = vld [vmem:[%s2] sm:$0xff]
        %v225 = vld [vmem:[%s3] ss:$0 sm:$0xff]
        %226 = xla_tuple %v224, %v225
        %227 = xla_tuple %226
        %v228 = vadd.f32 %v224, %v225
        %229 = xla_tuple %v228
        %s231 = ssub.s32 256, 1
        %232 = vst [vmem:[#allocation4] sm:%s231] %v228
        %v234 = vld [vmem:[%s222] sm:$0xff]
        %v235 = vld [vmem:[%s1] sm:$0xff]
        %v236 = vld [vmem:[%s1 + $0x8] sm:$0xff]
        %v237 = vld [vmem:[%s1 + $0x10] sm:$0xff]
        %v238 = vld [vmem:[%s1 + $0x18] sm:$0xff]
        %v239 = vld [vmem:[#allocation4] sm:$0xff]
        %v241 = vunpack.c.l.b16 %v234
        %v242 = vunpack.c.h.b16 %v234
        %v243 = vpack.c.b16 %v241, %v241
        %v244 = vpack.c.b16 %v242, %v242
        %v251 = vunpack.c.l.b16 %v235
        %v252 = vunpack.c.h.b16 %v235
        %v253 = vunpack.c.l.b16 %v236
        %v254 = vunpack.c.h.b16 %v236
        %v255 = vunpack.c.l.b16 %v237
        %v256 = vunpack.c.h.b16 %v237
        %v257 = vunpack.c.l.b16 %v238
        %v258 = vunpack.c.h.b16 %v238
        %v259 = vpack.c.b16 %v253, %v251
        %v260 = vpack.c.b16 %v254, %v252
        %v261 = vpack.c.b16 %v257, %v255
        %v262 = vpack.c.b16 %v258, %v256
        %267 = vmatpush.bf16.xpose.msra.mxu0 0
        %268 = vmatpush.bf16.xpose.msra.mxu0 0
        %269 = vmatpush.bf16.xpose.msra.mxu0 0
        %270 = vmatpush.bf16.xpose.msra.mxu0 0
        %271 = vmatpush.bf16.xpose.msra.mxu0 0
        %272 = vmatpush.bf16.xpose.msra.mxu0 0
        %273 = vmatpush.bf16.xpose.msra.mxu0 %v261
        %274 = vmatpush.bf16.xpose.msra.mxu0 %v259
        %275 = vmatmul.bf16.gmra.mxu0 %v243
        %v276 = vpop.f32.mrf.mxu0
        %v277 = vadd.f32 %v239, %v276
        %v278 = vpop.f32.mrf.mxu0
        %279 = vdwg.mxu0
        %280 = vmatpush.bf16.xpose.msra.mxu0 0
        %281 = vmatpush.bf16.xpose.msra.mxu0 0
        %282 = vmatpush.bf16.xpose.msra.mxu0 0
        %283 = vmatpush.bf16.xpose.msra.mxu0 0
        %284 = vmatpush.bf16.xpose.msra.mxu0 0
        %285 = vmatpush.bf16.xpose.msra.mxu0 0
        %286 = vmatpush.bf16.xpose.msra.mxu0 %v262
        %287 = vmatpush.bf16.xpose.msra.mxu0 %v260
        %288 = vmatmul.bf16.gmra.mxu0 %v244
        %v289 = vpop.f32.mrf.mxu0
        %v290 = vadd.f32 %v277, %v289
        %v291 = vpop.f32.mrf.mxu0
        %292 = vdwg.mxu0
        %vm293 = vcmask 261120
        %294 = vst.msk [vmem:[%s213] sm:$0xff] %vm293, %v290
        %s295 = sand.u32 %s129, 1
        %s296 = scalar_lea.sflag [#allocation3], %s295
        %s297 = sand.u32 %s129, 1
        %s298 = smul.addr %s297, 8
        %s299 = scalar_lea.vmem [#allocation2], %s298
        // Predicated region
        $region37: #{vit_patch_embedding.2} parent=35 // pred_check
          %p300 = pneg %p139
        $region38: #{vit_patch_embedding.2} parent=35 // pred_check_branch
          %302 = sbr.rel (%p300) target = $region40
        $region39: #{vit_patch_embedding.2} parent=35 // pred_region
          %304 = vsyncadd %s296, 0
          %s305 = smul.addr %s22, 8
          %s306 = scalar_lea.hbm %s4, %s305
          %s308 = sshll.u32 %s299, 4
          %s309 = int_to_ptr.vmem [resolvable:$true] %s308
          %s310 = sshll.u32 %s306, 4
          %s311 = int_to_ptr.hbm [resolvable:$true] %s310
          %313 = dma.vmem_to_hbm [thread:$0]  %s309, 128, %s311, %s296
        $region40: #{vit_patch_embedding.2} parent=35 // pred_fallthru
          _
      $region36: #{vit_patch_embedding.2} parent=5 // pred_fallthru
        _
      %p314 = scmp.le.s32.totalorder 2, %s13
      // Predicated region
      $region41: #{vit_patch_embedding.2} parent=5 // pred_check
        %p315 = pneg %p314
      $region42: #{vit_patch_embedding.2} parent=5 // pred_check_branch
        %317 = sbr.rel (%p315) target = $region44
      $region43: #{vit_patch_embedding.2} parent=5 // pred_region
        %s318 = ssub.s32 %s13, 2
        // Predicated region
        $region45: #{vit_patch_embedding.2} parent=43 // pred_check
          %p319 = pneg %p145
        $region46: #{vit_patch_embedding.2} parent=43 // pred_check_branch
          %321 = sbr.rel (%p319) target = $region48
        $region47: #{vit_patch_embedding.2} parent=43 // pred_region
          %s322 = sand.u32 %s130, 1
          %s323 = scalar_lea.sflag [#allocation3], %s322
          %s324 = sand.u32 %s130, 1
          %s325 = smul.addr %s324, 8
          %s326 = scalar_lea.vmem [#allocation2], %s325
          %328 = dma.done %s323, 128
        $region48: #{vit_patch_embedding.2} parent=43 // pred_fallthru
          _
      $region44: #{vit_patch_embedding.2} parent=5 // pred_fallthru
        _
    $region6: #{vit_patch_embedding.2} parent=1 // loop_footer
      %s17 = sadd.s32 1, %s13
    $region7: #{vit_patch_embedding.2} parent=1 // loop_footer_branch
      %12 = sbr.rel target = $region3
    $region8: #{vit_patch_embedding.2} parent=1 // loop_exit
      _
    %329 = vsyncpa [#allocation3], 1
    %s330 = scalar_lea.sflag [#allocation3], 1
    %331 = vsyncpa %s330, 1

</llo_original>
